<compile_context>
chip_gen: v7x
topology: tpu7x:2x2x1
jax: 0.10.0
libtpu: 0.0.40
codegen_flags: <defaults>
</compile_context>

<pallas_src>
import math
import functools

import jax
import jax.numpy as jnp
from jax import lax
from jax.experimental import pallas as pl
from jax.experimental.pallas import tpu as pltpu


def _attn_kernel(x_ref, wqkv_ref, bqkv_ref, wo_ref, bo_ref, o_ref, *,
                 scale, causal, n_head, dk):
    """One batch element per grid step.

    x_ref    : (S, D)   input tile for this batch element
    wqkv_ref : (D, 3D)  W_in^T, columns ordered [q | k | v]  (grid-resident)
    bqkv_ref : (1, 3D)  b_in                                 (grid-resident)
    wo_ref   : (D, D)   W_out^T                              (grid-resident)
    bo_ref   : (1, D)   b_out                                (grid-resident)
    o_ref    : (S, D)   output tile
    """
    S, D = x_ref.shape
    cd = x_ref.dtype          # MXU operand dtype (f32 here; bf16 in production)

    # --- fused QKV projection: one big MXU matmul per batch element ---
    qkv = jnp.dot(x_ref[...], wqkv_ref[...],
                  preferred_element_type=jnp.float32)
    qkv = qkv + bqkv_ref[...].astype(jnp.float32)            # (S, 3D) f32

    # --- causal bias built once per step, shared by every head ---
    if causal:
        row = lax.broadcasted_iota(jnp.int32, (S, S), 0)
        col = lax.broadcasted_iota(jnp.int32, (S, S), 1)
        # Large finite negative instead of -inf: the diagonal is never masked,
        # so no row can become fully masked.
        causal_bias = jnp.where(col <= row, 0.0, -1e30).astype(jnp.float32)

    # --- per-head softmax attention (n_head is static -> fully unrolled) ---
    outs = []
    for h in range(n_head):
        q = (qkv[:, h * dk:(h + 1) * dk] * scale).astype(cd)         # (S, dk)
        k = qkv[:, D + h * dk:D + (h + 1) * dk].astype(cd)           # (S, dk)
        v = qkv[:, 2 * D + h * dk:2 * D + (h + 1) * dk].astype(cd)   # (S, dk)

        # q @ k^T without materializing the transpose: contract dk directly.
        s = lax.dot_general(q, k, dimension_numbers=(((1,), (1,)), ((), ())),
                            preferred_element_type=jnp.float32)      # (S, S)
        if causal:
            s = s + causal_bias

        m = jnp.max(s, axis=-1, keepdims=True)
        p = jnp.exp(s - m)
        denom = jnp.sum(p, axis=-1, keepdims=True)

        # Normalize AFTER the PV matmul: S*dk multiplies instead of S*S; the
        # exact f32 reciprocal never quantizes the MXU operands.
        o_h = jnp.dot(p.astype(cd), v, preferred_element_type=jnp.float32)
        outs.append(o_h * (1.0 / denom))                              # (S, dk)

    ctx = jnp.concatenate(outs, axis=-1)                              # (S, D)

    # --- fused output projection: one matmul + bias, lane-dense store ---
    y = jnp.dot(ctx.astype(cd), wo_ref[...],
                preferred_element_type=jnp.float32)
    y = y + bo_ref[...].astype(jnp.float32)
    o_ref[...] = y.astype(o_ref.dtype)


def self_attention(x, w_in, b_in, w_out, b_out, *, n_head,
                   autoregressive=False, compute_dtype=None):
    """x: (B, S, D); w_in: (3D, D); b_in: (3D,); w_out: (D, D); b_out: (D,)."""
    B, S, D = x.shape
    assert D % n_head == 0
    dk = D // n_head
    scale = 1.0 / math.sqrt(dk)
    cd = x.dtype if compute_dtype is None else compute_dtype

    # Glue (plain JAX): the kernel consumes x @ W^T directly, so it only needs
    # the transposed weights -- no per-head repacking.
    x_cd = x.astype(cd)
    w_qkv = w_in.T.astype(cd)                         # (D, 3D), cols [q | k | v]
    b_qkv = b_in.reshape(1, 3 * D).astype(jnp.float32)
    w_o = w_out.T.astype(cd)                          # (D, D)
    b_o = b_out.reshape(1, D).astype(jnp.float32)

    kernel = functools.partial(_attn_kernel, scale=scale, causal=autoregressive,
                               n_head=n_head, dk=dk)

    # Explicit scoped-VMEM budget: double-buffered x/y tiles + resident weights
    # + live f32 intermediates, with 2x headroom (clamped to [32, 100] MiB).
    itm = jnp.dtype(cd).itemsize
    est = (itm * (D * 3 * D + D * D)                     # resident weights
           + 4 * (3 * D + D)                             # resident biases
           + 2 * 2 * S * D * 4                           # double-buffered x / y
           + 4 * (S * 3 * D + 2 * S * S + 2 * S * D))    # qkv, scores, ctx, y
    vmem_limit = int(min(100 * 2 ** 20, max(32 * 2 ** 20, 2 * est)))

    return pl.pallas_call(
        kernel,
        out_shape=jax.ShapeDtypeStruct((B, S, D), x.dtype),
        grid=(B,),
        in_specs=[
            pl.BlockSpec((None, S, D), lambda b: (b, 0, 0)),   # x tile per batch
            pl.BlockSpec((D, 3 * D), lambda b: (0, 0)),        # W_in^T  (resident)
            pl.BlockSpec((1, 3 * D), lambda b: (0, 0)),        # b_in    (resident)
            pl.BlockSpec((D, D), lambda b: (0, 0)),            # W_out^T (resident)
            pl.BlockSpec((1, D), lambda b: (0, 0)),            # b_out   (resident)
        ],
        out_specs=pl.BlockSpec((None, S, D), lambda b: (b, 0, 0)),
        compiler_params=pltpu.CompilerParams(
            dimension_semantics=("parallel",),
            vmem_limit_bytes=vmem_limit),
    )(x_cd, w_qkv, b_qkv, w_o, b_o)


def reference(x, w_in, b_in, w_out, b_out, *, n_head, autoregressive=False):
    """Pure-JAX reference mirroring the PyTorch forward (eval mode).

    Uses HIGHEST matmul precision so the f32 reference is actually f32 on TPU
    (the backend's DEFAULT precision truncates f32 matmuls to bf16 passes).
    """
    B, S, D = x.shape
    dk = D // n_head
    hp = jax.lax.Precision.HIGHEST
    qkv = jnp.dot(x, w_in.T, precision=hp) + b_in
    q, k, v = jnp.split(qkv, 3, axis=2)

    def heads(t):
        return t.reshape(B, S, n_head, dk).transpose(2, 0, 1, 3)   # (h,b,s,dk)

    q, k, v = heads(q), heads(k), heads(v)
    attn = jnp.einsum('hbsd,hbtd->hbst', q, k, precision=hp) / math.sqrt(dk)
    if autoregressive:
        mask = jnp.tril(jnp.ones((S, S)))[None, None]
        attn = jnp.where(mask == 0, -jnp.inf, attn)
    attn = jax.nn.softmax(attn, axis=3)
    out = jnp.einsum('hbst,hbtd->hbsd', attn, v, precision=hp)
    out = out.transpose(1, 2, 0, 3).reshape(B, S, D)
    return jnp.dot(out, w_out.T, precision=hp) + b_out


if __name__ == "__main__":
    B, S, d_model, n_head = 2, 8, 32, 4

    key = jax.random.PRNGKey(0)
    kx, kw1, kb1, kw2, kb2 = jax.random.split(key, 5)

    x = jax.random.normal(kx, (B, S, d_model), dtype=jnp.float32)
    # Deterministic synthetic parameters (shapes from nn.Linear in __init__).
    w_in = jax.random.normal(kw1, (3 * d_model, d_model), jnp.float32) / math.sqrt(d_model)
    b_in = jax.random.normal(kb1, (3 * d_model,), jnp.float32) * 0.02
    w_out = jax.random.normal(kw2, (d_model, d_model), jnp.float32) / math.sqrt(d_model)
    b_out = jax.random.normal(kb2, (d_model,), jnp.float32) * 0.02

    # Tolerance note: the compiled Mosaic f32 path matches the HIGHEST-precision
    # f32 reference to ~1e-5. If the kernel is executed under the Pallas
    # interpreter instead, its jnp.dot calls fall back to the TPU backend's
    # DEFAULT (bf16-pass) matmul precision; 2e-2 absorbs that case at these
    # shapes.
    for causal in (False, True):
        y = self_attention(x, w_in, b_in, w_out, b_out, n_head=n_head,
                           autoregressive=causal)
        y = jax.block_until_ready(y)
        y_ref = reference(x, w_in, b_in, w_out, b_out, n_head=n_head,
                          autoregressive=causal)
        assert y.shape == (B, S, d_model)
        max_err = float(jnp.max(jnp.abs(y - y_ref)))
        assert jnp.allclose(y, y_ref, atol=2e-2, rtol=2e-2), \
            f"mismatch vs reference (causal={causal}, max_abs_err={max_err})"

    print("KERNEL_OK")
</pallas_src>

<mosaic_0001>
module attributes {stable_mosaic.version = 11 : i64} {
  func.func @_attn_kernel(%arg0: i32, %arg1: memref<1x8x32xf32, #tpu.memory_space<vmem>>, %arg2: memref<32x96xf32, #tpu.memory_space<vmem>>, %arg3: memref<1x96xf32, #tpu.memory_space<vmem>>, %arg4: memref<32x32xf32, #tpu.memory_space<vmem>>, %arg5: memref<1x32xf32, #tpu.memory_space<vmem>>, %arg6: memref<1x8x32xf32, #tpu.memory_space<vmem>>) attributes {dimension_semantics = [#tpu.dimension_semantics<parallel>], iteration_bounds = array<i64: 2>, scalar_prefetch = 0 : i64, scratch_operands = 0 : i64, tpu.core_type = #tpu.core_type<tc>, window_params = [{transform_indices = @transform_0, window_bounds = array<i64: 1, 8, 32>}, {pipeline_mode = #tpu.pipeline_mode<synchronous>, transform_indices = @transform_1, window_bounds = array<i64: 32, 96>}, {pipeline_mode = #tpu.pipeline_mode<synchronous>, transform_indices = @transform_2, window_bounds = array<i64: 1, 96>}, {pipeline_mode = #tpu.pipeline_mode<synchronous>, transform_indices = @transform_3, window_bounds = array<i64: 32, 32>}, {pipeline_mode = #tpu.pipeline_mode<synchronous>, transform_indices = @transform_4, window_bounds = array<i64: 1, 32>}, {transform_indices = @transform_5, window_bounds = array<i64: 1, 8, 32>}]} {
    %c0 = arith.constant 0 : index
    %c0_0 = arith.constant 0 : index
    %c0_1 = arith.constant 0 : index
    %0 = vector.load %arg1[%c0, %c0_0, %c0_1] : memref<1x8x32xf32, #tpu.memory_space<vmem>>, vector<1x8x32xf32>
    %1 = vector.shape_cast %0 : vector<1x8x32xf32> to vector<8x32xf32>
    %c0_2 = arith.constant 0 : index
    %c0_3 = arith.constant 0 : index
    %2 = vector.load %arg2[%c0_2, %c0_3] : memref<32x96xf32, #tpu.memory_space<vmem>>, vector<32x96xf32>
    %cst = arith.constant dense<0.000000e+00> : vector<8x96xf32>
    %3 = tpu.matmul %1, %2, %cst {dimension_numbers = #tpu.dot_dimension_numbers<[1], [0], [0], [1], [0, 0, 1, 1], [], []>} : vector<8x32xf32>, vector<32x96xf32>, vector<8x96xf32> -> vector<8x96xf32>
    %c0_4 = arith.constant 0 : index
    %c0_5 = arith.constant 0 : index
    %4 = vector.load %arg3[%c0_4, %c0_5] : memref<1x96xf32, #tpu.memory_space<vmem>>, vector<1x96xf32>
    %5 = vector.broadcast %4 : vector<1x96xf32> to vector<8x96xf32>
    %6 = arith.addf %3, %5 : vector<8x96xf32>
    %7 = vector.extract_strided_slice %6 {offsets = [0, 0], sizes = [8, 8], strides = [1, 1]} : vector<8x96xf32> to vector<8x8xf32>
    %cst_6 = arith.constant 0.353553385 : f32
    %8 = vector.broadcast %cst_6 : f32 to vector<8x8xf32>
    %9 = arith.mulf %7, %8 : vector<8x8xf32>
    %10 = vector.extract_strided_slice %6 {offsets = [0, 32], sizes = [8, 8], strides = [1, 1]} : vector<8x96xf32> to vector<8x8xf32>
    %11 = vector.extract_strided_slice %6 {offsets = [0, 64], sizes = [8, 8], strides = [1, 1]} : vector<8x96xf32> to vector<8x8xf32>
    %cst_7 = arith.constant dense<0.000000e+00> : vector<8x8xf32>
    %12 = tpu.matmul %9, %10, %cst_7 {dimension_numbers = #tpu.dot_dimension_numbers<[1], [1], [0], [0], [0, 0, 1, 0], [], []>} : vector<8x8xf32>, vector<8x8xf32>, vector<8x8xf32> -> vector<8x8xf32>
    %cst_8 = arith.constant dense<0xFF800000> : vector<8xf32>
    %13 = vector.multi_reduction <maximumf>, %12, %cst_8 [1] : vector<8x8xf32> to vector<8xf32>
    %14 = vector.shape_cast %13 : vector<8xf32> to vector<8x1xf32>
    %15 = vector.broadcast %14 : vector<8x1xf32> to vector<8x8xf32>
    %16 = arith.subf %12, %15 : vector<8x8xf32>
    %17 = math.exp %16 : vector<8x8xf32>
    %cst_9 = arith.constant dense<0.000000e+00> : vector<8xf32>
    %18 = vector.multi_reduction <add>, %17, %cst_9 [1] : vector<8x8xf32> to vector<8xf32>
    %19 = vector.shape_cast %18 : vector<8xf32> to vector<8x1xf32>
    %cst_10 = arith.constant dense<0.000000e+00> : vector<8x8xf32>
    %20 = tpu.matmul %17, %11, %cst_10 {dimension_numbers = #tpu.dot_dimension_numbers<[1], [0], [0], [1], [0, 0, 1, 1], [], []>} : vector<8x8xf32>, vector<8x8xf32>, vector<8x8xf32> -> vector<8x8xf32>
    %cst_11 = arith.constant 1.000000e+00 : f32
    %21 = vector.broadcast %cst_11 : f32 to vector<8x1xf32>
    %22 = arith.divf %21, %19 : vector<8x1xf32>
    %23 = vector.broadcast %22 : vector<8x1xf32> to vector<8x8xf32>
    %24 = arith.mulf %20, %23 : vector<8x8xf32>
    %25 = vector.extract_strided_slice %6 {offsets = [0, 8], sizes = [8, 8], strides = [1, 1]} : vector<8x96xf32> to vector<8x8xf32>
    %cst_12 = arith.constant 0.353553385 : f32
    %26 = vector.broadcast %cst_12 : f32 to vector<8x8xf32>
    %27 = arith.mulf %25, %26 : vector<8x8xf32>
    %28 = vector.extract_strided_slice %6 {offsets = [0, 40], sizes = [8, 8], strides = [1, 1]} : vector<8x96xf32> to vector<8x8xf32>
    %29 = vector.extract_strided_slice %6 {offsets = [0, 72], sizes = [8, 8], strides = [1, 1]} : vector<8x96xf32> to vector<8x8xf32>
    %cst_13 = arith.constant dense<0.000000e+00> : vector<8x8xf32>
    %30 = tpu.matmul %27, %28, %cst_13 {dimension_numbers = #tpu.dot_dimension_numbers<[1], [1], [0], [0], [0, 0, 1, 0], [], []>} : vector<8x8xf32>, vector<8x8xf32>, vector<8x8xf32> -> vector<8x8xf32>
    %cst_14 = arith.constant dense<0xFF800000> : vector<8xf32>
    %31 = vector.multi_reduction <maximumf>, %30, %cst_14 [1] : vector<8x8xf32> to vector<8xf32>
    %32 = vector.shape_cast %31 : vector<8xf32> to vector<8x1xf32>
    %33 = vector.broadcast %32 : vector<8x1xf32> to vector<8x8xf32>
    %34 = arith.subf %30, %33 : vector<8x8xf32>
    %35 = math.exp %34 : vector<8x8xf32>
    %cst_15 = arith.constant dense<0.000000e+00> : vector<8xf32>
    %36 = vector.multi_reduction <add>, %35, %cst_15 [1] : vector<8x8xf32> to vector<8xf32>
    %37 = vector.shape_cast %36 : vector<8xf32> to vector<8x1xf32>
    %cst_16 = arith.constant dense<0.000000e+00> : vector<8x8xf32>
    %38 = tpu.matmul %35, %29, %cst_16 {dimension_numbers = #tpu.dot_dimension_numbers<[1], [0], [0], [1], [0, 0, 1, 1], [], []>} : vector<8x8xf32>, vector<8x8xf32>, vector<8x8xf32> -> vector<8x8xf32>
    %cst_17 = arith.constant 1.000000e+00 : f32
    %39 = vector.broadcast %cst_17 : f32 to vector<8x1xf32>
    %40 = arith.divf %39, %37 : vector<8x1xf32>
    %41 = vector.broadcast %40 : vector<8x1xf32> to vector<8x8xf32>
    %42 = arith.mulf %38, %41 : vector<8x8xf32>
    %43 = vector.extract_strided_slice %6 {offsets = [0, 16], sizes = [8, 8], strides = [1, 1]} : vector<8x96xf32> to vector<8x8xf32>
    %cst_18 = arith.constant 0.353553385 : f32
    %44 = vector.broadcast %cst_18 : f32 to vector<8x8xf32>
    %45 = arith.mulf %43, %44 : vector<8x8xf32>
    %46 = vector.extract_strided_slice %6 {offsets = [0, 48], sizes = [8, 8], strides = [1, 1]} : vector<8x96xf32> to vector<8x8xf32>
    %47 = vector.extract_strided_slice %6 {offsets = [0, 80], sizes = [8, 8], strides = [1, 1]} : vector<8x96xf32> to vector<8x8xf32>
    %cst_19 = arith.constant dense<0.000000e+00> : vector<8x8xf32>
    %48 = tpu.matmul %45, %46, %cst_19 {dimension_numbers = #tpu.dot_dimension_numbers<[1], [1], [0], [0], [0, 0, 1, 0], [], []>} : vector<8x8xf32>, vector<8x8xf32>, vector<8x8xf32> -> vector<8x8xf32>
    %cst_20 = arith.constant dense<0xFF800000> : vector<8xf32>
    %49 = vector.multi_reduction <maximumf>, %48, %cst_20 [1] : vector<8x8xf32> to vector<8xf32>
    %50 = vector.shape_cast %49 : vector<8xf32> to vector<8x1xf32>
    %51 = vector.broadcast %50 : vector<8x1xf32> to vector<8x8xf32>
    %52 = arith.subf %48, %51 : vector<8x8xf32>
    %53 = math.exp %52 : vector<8x8xf32>
    %cst_21 = arith.constant dense<0.000000e+00> : vector<8xf32>
    %54 = vector.multi_reduction <add>, %53, %cst_21 [1] : vector<8x8xf32> to vector<8xf32>
    %55 = vector.shape_cast %54 : vector<8xf32> to vector<8x1xf32>
    %cst_22 = arith.constant dense<0.000000e+00> : vector<8x8xf32>
    %56 = tpu.matmul %53, %47, %cst_22 {dimension_numbers = #tpu.dot_dimension_numbers<[1], [0], [0], [1], [0, 0, 1, 1], [], []>} : vector<8x8xf32>, vector<8x8xf32>, vector<8x8xf32> -> vector<8x8xf32>
    %cst_23 = arith.constant 1.000000e+00 : f32
    %57 = vector.broadcast %cst_23 : f32 to vector<8x1xf32>
    %58 = arith.divf %57, %55 : vector<8x1xf32>
    %59 = vector.broadcast %58 : vector<8x1xf32> to vector<8x8xf32>
    %60 = arith.mulf %56, %59 : vector<8x8xf32>
    %61 = vector.extract_strided_slice %6 {offsets = [0, 24], sizes = [8, 8], strides = [1, 1]} : vector<8x96xf32> to vector<8x8xf32>
    %cst_24 = arith.constant 0.353553385 : f32
    %62 = vector.broadcast %cst_24 : f32 to vector<8x8xf32>
    %63 = arith.mulf %61, %62 : vector<8x8xf32>
    %64 = vector.extract_strided_slice %6 {offsets = [0, 56], sizes = [8, 8], strides = [1, 1]} : vector<8x96xf32> to vector<8x8xf32>
    %65 = vector.extract_strided_slice %6 {offsets = [0, 88], sizes = [8, 8], strides = [1, 1]} : vector<8x96xf32> to vector<8x8xf32>
    %cst_25 = arith.constant dense<0.000000e+00> : vector<8x8xf32>
    %66 = tpu.matmul %63, %64, %cst_25 {dimension_numbers = #tpu.dot_dimension_numbers<[1], [1], [0], [0], [0, 0, 1, 0], [], []>} : vector<8x8xf32>, vector<8x8xf32>, vector<8x8xf32> -> vector<8x8xf32>
    %cst_26 = arith.constant dense<0xFF800000> : vector<8xf32>
    %67 = vector.multi_reduction <maximumf>, %66, %cst_26 [1] : vector<8x8xf32> to vector<8xf32>
    %68 = vector.shape_cast %67 : vector<8xf32> to vector<8x1xf32>
    %69 = vector.broadcast %68 : vector<8x1xf32> to vector<8x8xf32>
    %70 = arith.subf %66, %69 : vector<8x8xf32>
    %71 = math.exp %70 : vector<8x8xf32>
    %cst_27 = arith.constant dense<0.000000e+00> : vector<8xf32>
    %72 = vector.multi_reduction <add>, %71, %cst_27 [1] : vector<8x8xf32> to vector<8xf32>
    %73 = vector.shape_cast %72 : vector<8xf32> to vector<8x1xf32>
    %cst_28 = arith.constant dense<0.000000e+00> : vector<8x8xf32>
    %74 = tpu.matmul %71, %65, %cst_28 {dimension_numbers = #tpu.dot_dimension_numbers<[1], [0], [0], [1], [0, 0, 1, 1], [], []>} : vector<8x8xf32>, vector<8x8xf32>, vector<8x8xf32> -> vector<8x8xf32>
    %cst_29 = arith.constant 1.000000e+00 : f32
    %75 = vector.broadcast %cst_29 : f32 to vector<8x1xf32>
    %76 = arith.divf %75, %73 : vector<8x1xf32>
    %77 = vector.broadcast %76 : vector<8x1xf32> to vector<8x8xf32>
    %78 = arith.mulf %74, %77 : vector<8x8xf32>
    %79 = tpu.concatenate %24, %42, %60, %78 in 1 : vector<8x8xf32>, vector<8x8xf32>, vector<8x8xf32>, vector<8x8xf32> -> vector<8x32xf32>
    %c0_30 = arith.constant 0 : index
    %c0_31 = arith.constant 0 : index
    %80 = vector.load %arg4[%c0_30, %c0_31] : memref<32x32xf32, #tpu.memory_space<vmem>>, vector<32x32xf32>
    %cst_32 = arith.constant dense<0.000000e+00> : vector<8x32xf32>
    %81 = tpu.matmul %79, %80, %cst_32 {dimension_numbers = #tpu.dot_dimension_numbers<[1], [0], [0], [1], [0, 0, 1, 1], [], []>} : vector<8x32xf32>, vector<32x32xf32>, vector<8x32xf32> -> vector<8x32xf32>
    %c0_33 = arith.constant 0 : index
    %c0_34 = arith.constant 0 : index
    %82 = vector.load %arg5[%c0_33, %c0_34] : memref<1x32xf32, #tpu.memory_space<vmem>>, vector<1x32xf32>
    %83 = vector.broadcast %82 : vector<1x32xf32> to vector<8x32xf32>
    %84 = arith.addf %81, %83 : vector<8x32xf32>
    %c0_35 = arith.constant 0 : index
    %c0_36 = arith.constant 0 : index
    %c0_37 = arith.constant 0 : index
    %85 = vector.load %arg6[%c0_35, %c0_36, %c0_37] : memref<1x8x32xf32, #tpu.memory_space<vmem>>, vector<1x8x32xf32>
    %86 = vector.shape_cast %85 : vector<1x8x32xf32> to vector<8x32xf32>
    %87 = vector.shape_cast %84 : vector<8x32xf32> to vector<1x8x32xf32>
    tpu.vector_store %arg6[%c0_35, %c0_36, %c0_37], %87 {strides = array<i32>} : memref<1x8x32xf32, #tpu.memory_space<vmem>>, vector<1x8x32xf32>,
    return
  }
  func.func @transform_0(%arg0: i32) -> (i32, i32, i32) {
    %c0_i32 = arith.constant 0 : i32
    %c0_i32_0 = arith.constant 0 : i32
    %c0_i32_1 = arith.constant 0 : i32
    return %arg0, %c0_i32, %c0_i32_0 : i32, i32, i32
  }
  func.func @transform_1(%arg0: i32) -> (i32, i32) {
    %c0_i32 = arith.constant 0 : i32
    %c0_i32_0 = arith.constant 0 : i32
    %c0_i32_1 = arith.constant 0 : i32
    return %c0_i32, %c0_i32_0 : i32, i32
  }
  func.func @transform_2(%arg0: i32) -> (i32, i32) {
    %c0_i32 = arith.constant 0 : i32
    %c0_i32_0 = arith.constant 0 : i32
    %c0_i32_1 = arith.constant 0 : i32
    return %c0_i32, %c0_i32_0 : i32, i32
  }
  func.func @transform_3(%arg0: i32) -> (i32, i32) {
    %c0_i32 = arith.constant 0 : i32
    %c0_i32_0 = arith.constant 0 : i32
    %c0_i32_1 = arith.constant 0 : i32
    return %c0_i32, %c0_i32_0 : i32, i32
  }
  func.func @transform_4(%arg0: i32) -> (i32, i32) {
    %c0_i32 = arith.constant 0 : i32
    %c0_i32_0 = arith.constant 0 : i32
    %c0_i32_1 = arith.constant 0 : i32
    return %c0_i32, %c0_i32_0 : i32, i32
  }
  func.func @transform_5(%arg0: i32) -> (i32, i32, i32) {
    %c0_i32 = arith.constant 0 : i32
    %c0_i32_0 = arith.constant 0 : i32
    %c0_i32_1 = arith.constant 0 : i32
    return %arg0, %c0_i32, %c0_i32_0 : i32, i32, i32
  }
}

</mosaic_0001>

<llo_original>
// kernel: tpu_custom_call.1
$region0: #{tpu_custom_call.1}
  #allocation0 [shape = 'u32[]', space=smem, size = 0x4, offset = 0x4, fixed_abs, tag = 'smem constant byte address 0x4 - core index']
  #allocation1 [shape = 'u32[144,128]{1,0:T(1,128)}', space=vmem, size = 0x12000, scoped, tag = 'internal scratch']
  %s0 = inlined_call_operand.hbm [shape: f32[2,8,32], index: 0, kind: input, shape index: {}]
  %s1 = inlined_call_operand.hbm [shape: f32[32,96], index: 1, kind: input, shape index: {}]
  %s2 = inlined_call_operand.vmem [shape: f32[1,96], index: 2, kind: input, shape index: {}]
  %s3 = inlined_call_operand.hbm [shape: f32[32,32], index: 3, kind: input, shape index: {}]
  %s4 = inlined_call_operand.vmem [shape: f32[1,32], index: 4, kind: input, shape index: {}]
  %s5 = inlined_call_operand.hbm [shape: f32[2,8,32], index: 5, kind: output, shape index: {}]
  %s6 = sld [smem:[#allocation0]]
  $region65: #{tpu_custom_call.1} parent=0
    _
  %s8 = ssub.s32 1, %s6
  %s9 = scalar_select 0, %s8, %s6
  $region1: #{tpu_custom_call.1} parent=0
    #allocation2 [shape = 'u8[8192]{0}', space=vmem, size = 0x2000, scoped, tag = 'input window, operand 0']
    #allocation3 [shape = 's32[2]{0}', space=sflag, size = 0x8, scoped, tag = 'scoped memory for tpu_custom_call.1']
    #allocation4 [shape = 's32[2]{0}', space=sflag, size = 0x8, scoped, tag = 'scoped memory for tpu_custom_call.1']
    #allocation5 [shape = 'u8[16384]{0}', space=vmem, size = 0x4000, scoped, tag = 'input window, operand 1, single buffered']
    #allocation6 [shape = 's32[1]{0}', space=sflag, size = 0x4, scoped, tag = 'scoped memory for tpu_custom_call.1']
    #allocation7 [shape = 'u8[16384]{0}', space=vmem, size = 0x4000, scoped, tag = 'input window, operand 3, single buffered']
    #allocation8 [shape = 'u8[8192]{0}', space=vmem, size = 0x2000, scoped, tag = 'output window, operand 0']
    %10 = vsyncpa [#allocation3], 0
    %s11 = scalar_lea.sflag [#allocation3], 1
    %12 = vsyncpa %s11, 0
    %13 = vsyncpa [#allocation6], 0
    %14 = vsyncpa [#allocation4], 0
    %s15 = scalar_lea.sflag [#allocation4], 1
    %16 = vsyncpa %s15, 0
    loop: start=0, step=1, limit=4
    $region2: #{tpu_custom_call.1} parent=1 // loop_pre_header
      _
    $region3: #{tpu_custom_call.1} parent=1 // loop_header
      %s18 = sphi 0, %s22
      %p19 = scmp.ge.s32.totalorder %s18, 4
      %s28 = sphi 0, %s30
      %s31 = sphi 0, %s28
      %s32 = sphi 0, %s31
      %s48 = sphi 0, %s32
      %s52 = sphi 0, %s52
      %s54 = sphi 0, %s52
      %s55 = sphi 0, %s54
      %s69 = sphi 0, %s55
      %s73 = sphi 0, %s73
      %s75 = sphi 0, %s73
      %s76 = sphi 0, %s75
      %s90 = sphi 0, %s76
      %s94 = sphi 0, %s94
      %s96 = sphi 0, %s94
      %s97 = sphi 0, %s96
      %s111 = sphi 0, %s97
      %s115 = sphi 0, %s115
      %s117 = sphi 0, %s115
      %s118 = sphi 0, %s117
      %s132 = sphi 0, %s118
      %s138 = sphi 0, %s140
      %s141 = sphi 0, %s138
      %s142 = sphi 0, %s141
      %s158 = sphi 0, %s142
    $region4: #{tpu_custom_call.1} parent=1 // loop_header_branch
      %21 = sbr.rel (%p19) target = $region8
    $region5: #{tpu_custom_call.1} parent=1 // loop_body
      %s23 = ssub.s32 %s18, 1
      %s24 = ssub.s32 %s18, 2
      %s25 = sadd.s32 %s18, 1
      %s26 = ssub.s32 %s18, %s25
      %p27 = scmp.eq.s32.totalorder %s26, 0
      %s29 = sadd.s32 %s28, 1
      %s30 = scalar_select %p27, %s28, %s29
      %p33 = pneg %p27
      %p34 = scmp.eq.s32.totalorder %s18, 1
      %p35 = por %p33, %p34
      %p36 = scmp.ne.s32.totalorder %s28, %s31
      %p37 = scmp.eq.s32.totalorder %s18, 0
      %p38 = por %p36, %p37
      %p39 = scmp.ne.s32.totalorder %s28, %s31
      %p40 = scmp.eq.s32.totalorder %s23, 1
      %p41 = por %p39, %p40
      %p42 = scmp.ne.s32.totalorder %s31, %s32
      %p43 = scmp.eq.s32.totalorder %s23, 0
      %p44 = por %p42, %p43
      %p45 = scmp.ne.s32.totalorder %s31, %s32
      %p46 = scmp.eq.s32.totalorder %s24, 1
      %p47 = por %p45, %p46
      %p49 = scmp.ne.s32.totalorder %s32, %s48
      %p50 = scmp.eq.s32.totalorder %s24, 0
      %p51 = por %p49, %p50
      %s53 = sadd.s32 %s52, 1
      %p56 = scmp.eq.s32.totalorder %s18, 1
      %p57 = scmp.ne.s32.totalorder %s52, %s54
      %p58 = scmp.eq.s32.totalorder %s18, 0
      %p59 = por %p57, %p58
      %p60 = scmp.ne.s32.totalorder %s52, %s54
      %p61 = scmp.eq.s32.totalorder %s23, 1
      %p62 = por %p60, %p61
      %p63 = scmp.ne.s32.totalorder %s54, %s55
      %p64 = scmp.eq.s32.totalorder %s23, 0
      %p65 = por %p63, %p64
      %p66 = scmp.ne.s32.totalorder %s54, %s55
      %p67 = scmp.eq.s32.totalorder %s24, 1
      %p68 = por %p66, %p67
      %p70 = scmp.ne.s32.totalorder %s55, %s69
      %p71 = scmp.eq.s32.totalorder %s24, 0
      %p72 = por %p70, %p71
      %s74 = sadd.s32 %s73, 1
      %p77 = scmp.eq.s32.totalorder %s18, 1
      %p78 = scmp.ne.s32.totalorder %s73, %s75
      %p79 = scmp.eq.s32.totalorder %s18, 0
      %p80 = por %p78, %p79
      %p81 = scmp.ne.s32.totalorder %s73, %s75
      %p82 = scmp.eq.s32.totalorder %s23, 1
      %p83 = por %p81, %p82
      %p84 = scmp.ne.s32.totalorder %s75, %s76
      %p85 = scmp.eq.s32.totalorder %s23, 0
      %p86 = por %p84, %p85
      %p87 = scmp.ne.s32.totalorder %s75, %s76
      %p88 = scmp.eq.s32.totalorder %s24, 1
      %p89 = por %p87, %p88
      %p91 = scmp.ne.s32.totalorder %s76, %s90
      %p92 = scmp.eq.s32.totalorder %s24, 0
      %p93 = por %p91, %p92
      %s95 = sadd.s32 %s94, 1
      %p98 = scmp.eq.s32.totalorder %s18, 1
      %p99 = scmp.ne.s32.totalorder %s94, %s96
      %p100 = scmp.eq.s32.totalorder %s18, 0
      %p101 = por %p99, %p100
      %p102 = scmp.ne.s32.totalorder %s94, %s96
      %p103 = scmp.eq.s32.totalorder %s23, 1
      %p104 = por %p102, %p103
      %p105 = scmp.ne.s32.totalorder %s96, %s97
      %p106 = scmp.eq.s32.totalorder %s23, 0
      %p107 = por %p105, %p106
      %p108 = scmp.ne.s32.totalorder %s96, %s97
      %p109 = scmp.eq.s32.totalorder %s24, 1
      %p110 = por %p108, %p109
      %p112 = scmp.ne.s32.totalorder %s97, %s111
      %p113 = scmp.eq.s32.totalorder %s24, 0
      %p114 = por %p112, %p113
      %s116 = sadd.s32 %s115, 1
      %p119 = scmp.eq.s32.totalorder %s18, 1
      %p120 = scmp.ne.s32.totalorder %s115, %s117
      %p121 = scmp.eq.s32.totalorder %s18, 0
      %p122 = por %p120, %p121
      %p123 = scmp.ne.s32.totalorder %s115, %s117
      %p124 = scmp.eq.s32.totalorder %s23, 1
      %p125 = por %p123, %p124
      %p126 = scmp.ne.s32.totalorder %s117, %s118
      %p127 = scmp.eq.s32.totalorder %s23, 0
      %p128 = por %p126, %p127
      %p129 = scmp.ne.s32.totalorder %s117, %s118
      %p130 = scmp.eq.s32.totalorder %s24, 1
      %p131 = por %p129, %p130
      %p133 = scmp.ne.s32.totalorder %s118, %s132
      %p134 = scmp.eq.s32.totalorder %s24, 0
      %p135 = por %p133, %p134
      %s136 = ssub.s32 %s18, %s25
      %p137 = scmp.eq.s32.totalorder %s136, 0
      %s139 = sadd.s32 %s138, 1
      %s140 = scalar_select %p137, %s138, %s139
      %p143 = pneg %p137
      %p144 = scmp.eq.s32.totalorder %s18, 1
      %p145 = por %p143, %p144
      %p146 = scmp.ne.s32.totalorder %s138, %s141
      %p147 = scmp.eq.s32.totalorder %s18, 0
      %p148 = por %p146, %p147
      %p149 = scmp.ne.s32.totalorder %s138, %s141
      %p150 = scmp.eq.s32.totalorder %s23, 1
      %p151 = por %p149, %p150
      %p152 = scmp.ne.s32.totalorder %s141, %s142
      %p153 = scmp.eq.s32.totalorder %s23, 0
      %p154 = por %p152, %p153
      %p155 = scmp.ne.s32.totalorder %s141, %s142
      %p156 = scmp.eq.s32.totalorder %s24, 1
      %p157 = por %p155, %p156
      %p159 = scmp.ne.s32.totalorder %s142, %s158
      %p160 = scmp.eq.s32.totalorder %s24, 0
      %p161 = por %p159, %p160
      %p162 = scmp.le.s32.totalorder 1, %s18
      %p163 = scmp.lt.s32.totalorder %s18, 3
      %p164 = pnand %p162, %p163
      %p165 = pneg %p164
      // Predicated region
      $region9: #{tpu_custom_call.1} parent=5 // pred_check
        _
      $region10: #{tpu_custom_call.1} parent=5 // pred_check_branch
        %167 = sbr.rel (%p164) target = $region12
      $region11: #{tpu_custom_call.1} parent=5 // pred_region
        %s168 = ssub.s32 %s18, 1
        // Predicated region
        $region13: #{tpu_custom_call.1} parent=11 // pred_check
          %p169 = pneg %p65
        $region14: #{tpu_custom_call.1} parent=11 // pred_check_branch
          %171 = sbr.rel (%p169) target = $region16
        $region15: #{tpu_custom_call.1} parent=11 // pred_region
          %s173 = ssub.s32 512, 512
          %174 = vsyncadd [#allocation6], %s173
          %s175 = sshll.u32 [#allocation5], 4
          %s176 = int_to_ptr.vmem [resolvable:$true] %s175
          %181 = dma.hbm_to_vmem [thread:$0]  %s1, 512, %s176, [#allocation6], 128, 128, 8
        $region16: #{tpu_custom_call.1} parent=11 // pred_fallthru
          _
        // Predicated region
        $region17: #{tpu_custom_call.1} parent=11 // pred_check
          %p182 = pneg %p86
        $region18: #{tpu_custom_call.1} parent=11 // pred_check_branch
          %184 = sbr.rel (%p182) target = $region20
        $region19: #{tpu_custom_call.1} parent=11 // pred_region
          _
        $region20: #{tpu_custom_call.1} parent=11 // pred_fallthru
          _
        // Predicated region
        $region21: #{tpu_custom_call.1} parent=11 // pred_check
          %p185 = pneg %p107
        $region22: #{tpu_custom_call.1} parent=11 // pred_check_branch
          %187 = sbr.rel (%p185) target = $region24
        $region23: #{tpu_custom_call.1} parent=11 // pred_region
          %s189 = ssub.s32 512, 512
          %190 = vsyncadd [#allocation6], %s189
          %s191 = sshll.u32 [#allocation7], 4
          %s192 = int_to_ptr.vmem [resolvable:$true] %s191
          %197 = dma.hbm_to_vmem [thread:$0]  %s3, 512, %s192, [#allocation6], 128, 128, 8
        $region24: #{tpu_custom_call.1} parent=11 // pred_fallthru
          _
        // Predicated region
        $region25: #{tpu_custom_call.1} parent=11 // pred_check
          %p198 = pneg %p128
        $region26: #{tpu_custom_call.1} parent=11 // pred_check_branch
          %200 = sbr.rel (%p198) target = $region28
        $region27: #{tpu_custom_call.1} parent=11 // pred_region
          _
        $region28: #{tpu_custom_call.1} parent=11 // pred_fallthru
          _
      $region12: #{tpu_custom_call.1} parent=5 // pred_fallthru
        _
      %p201 = scmp.lt.s32.totalorder %s18, 2
      // Predicated region
      $region29: #{tpu_custom_call.1} parent=5 // pred_check
        %p202 = pneg %p201
      $region30: #{tpu_custom_call.1} parent=5 // pred_check_branch
        %204 = sbr.rel (%p202) target = $region32
      $region31: #{tpu_custom_call.1} parent=5 // pred_region
        // Predicated region
        $region33: #{tpu_custom_call.1} parent=31 // pred_check
          %p205 = pneg %p38
        $region34: #{tpu_custom_call.1} parent=31 // pred_check_branch
          %207 = sbr.rel (%p205) target = $region36
        $region35: #{tpu_custom_call.1} parent=31 // pred_region
          %s208 = sand.u32 %s28, 1
          %s209 = scalar_lea.sflag [#allocation3], %s208
          %s210 = sand.u32 %s28, 1
          %s211 = smul.addr %s210, 8
          %s212 = scalar_lea.vmem [#allocation2], %s211
          %s214 = ssub.s32 128, 128
          %215 = vsyncadd %s209, %s214
          %s216 = smul.addr %s18, 128
          %s217 = scalar_lea.hbm %s0, %s216
          %s219 = sshll.u32 %s212, 4
          %s220 = int_to_ptr.vmem [resolvable:$true] %s219
          %222 = dma.hbm_to_vmem [thread:$0]  %s217, 128, %s220, %s209
        $region36: #{tpu_custom_call.1} parent=31 // pred_fallthru
          _
      $region32: #{tpu_custom_call.1} parent=5 // pred_fallthru
        _
      %p223 = scmp.le.s32.totalorder 1, %s18
      %p224 = scmp.lt.s32.totalorder %s18, 3
      %p225 = pnand %p223, %p224
      %p226 = pneg %p225
      // Predicated region
      $region37: #{tpu_custom_call.1} parent=5 // pred_check
        _
      $region38: #{tpu_custom_call.1} parent=5 // pred_check_branch
        %228 = sbr.rel (%p225) target = $region40
      $region39: #{tpu_custom_call.1} parent=5 // pred_region
        %s229 = ssub.s32 %s18, 1
        %s230 = sand.u32 %s31, 1
        %s231 = scalar_lea.sflag [#allocation3], %s230
        %s232 = sand.u32 %s31, 1
        %s233 = smul.addr %s232, 8
        %s234 = scalar_lea.vmem [#allocation2], %s233
        // Predicated region
        $region41: #{tpu_custom_call.1} parent=39 // pred_check
          %p235 = pneg %p44
        $region42: #{tpu_custom_call.1} parent=39 // pred_check_branch
          %237 = sbr.rel (%p235) target = $region44
        $region43: #{tpu_custom_call.1} parent=39 // pred_region
          %238 = dma.done %s231, 128
        $region44: #{tpu_custom_call.1} parent=39 // pred_fallthru
          _
        // Predicated region
        $region45: #{tpu_custom_call.1} parent=39 // pred_check
          %p239 = pneg %p65
        $region46: #{tpu_custom_call.1} parent=39 // pred_check_branch
          %241 = sbr.rel (%p239) target = $region48
        $region47: #{tpu_custom_call.1} parent=39 // pred_region
          %242 = dma.done [#allocation6], 512
        $region48: #{tpu_custom_call.1} parent=39 // pred_fallthru
          _
        // Predicated region
        $region49: #{tpu_custom_call.1} parent=39 // pred_check
          %p243 = pneg %p107
        $region50: #{tpu_custom_call.1} parent=39 // pred_check_branch
          %245 = sbr.rel (%p243) target = $region52
        $region51: #{tpu_custom_call.1} parent=39 // pred_region
          %246 = dma.done [#allocation6], 512
        $region52: #{tpu_custom_call.1} parent=39 // pred_fallthru
          _
        %s247 = sand.u32 %s31, 1
        %s248 = scalar_lea.sflag [#allocation3], %s247
        %s249 = sand.u32 %s31, 1
        %s250 = smul.addr %s249, 8
        %s251 = scalar_lea.vmem [#allocation2], %s250
        %p252 = pneg %p44
        %p253 = pneg %p41
        %p254 = pneg %p65
        %p255 = pneg %p62
        %p256 = pneg %p86
        %p257 = pneg %p83
        %p258 = pneg %p107
        %p259 = pneg %p104
        %p260 = pneg %p128
        %p261 = pneg %p125
        %p262 = pneg %p154
        %p263 = pneg %p151
        %s264 = sand.u32 %s141, 1
        %s265 = scalar_lea.sflag [#allocation4], %s264
        %s266 = sand.u32 %s141, 1
        %s267 = smul.addr %s266, 8
        %s268 = scalar_lea.vmem [#allocation8], %s267
        %v269 = vld [vmem:[%s234] sm:$0xff]
        %v270 = vld [vmem:[#allocation5] sm:$0xff]
        %v271 = vld [vmem:[#allocation5 + $0x8] sm:$0xff]
        %v272 = vld [vmem:[#allocation5 + $0x10] sm:$0xff]
        %v273 = vld [vmem:[#allocation5 + $0x18] sm:$0xff]
        %v274 = vld [vmem:[%s2] sm:$0x1]
        %v276 = vlaneseq
        %v277 = vshrl.u32 %v276, 7
        %v278 = vsub.s32 0, %v277
        %v279 = vrot.slane %v274, %v278
        %vm281 = vcmask 261120
        %v283 = vsel %vm281, %v269, 0
        %285 = vmatprep.subr.mxu0 0.0
        %286 = vmatpush1.msra.mxu0 %v270
        %287 = vmatprep.subr.mxu0 0.0
        %288 = vmatpush1.msra.mxu0 %v271
        %289 = vmatprep.subr.mxu0 0.0
        %290 = vmatpush1.msra.mxu0 %v272
        %291 = vmatprep.subr.mxu0 0.0
        %292 = vmatpush1.msra.mxu0 %v273
        %293 = vmatprep.subr.mxu0 0.0
        %294 = vmatpush1.msra.mxu0 0.0
        %295 = vmatprep.subr.mxu0 0.0
        %296 = vmatpush1.msra.mxu0 0.0
        %297 = vmatprep.subr.mxu0 0.0
        %298 = vmatpush1.msra.mxu0 0.0
        %299 = vmatprep.subr.mxu0 0.0
        %300 = vmatpush1.msra.mxu0 0.0
        %301 = vmatprep.subr.mxu0 0.0
        %302 = vmatpush1.msra.mxu0 0.0
        %303 = vmatprep.subr.mxu0 0.0
        %304 = vmatpush1.msra.mxu0 0.0
        %305 = vmatprep.subr.mxu0 0.0
        %306 = vmatpush1.msra.mxu0 0.0
        %307 = vmatprep.subr.mxu0 0.0
        %308 = vmatpush1.msra.mxu0 0.0
        %309 = vmatprep.subr.mxu0 0.0
        %310 = vmatpush1.msra.mxu0 0.0
        %311 = vmatprep.subr.mxu0 0.0
        %312 = vmatpush1.msra.mxu0 0.0
        %313 = vmatprep.subr.mxu0 0.0
        %314 = vmatpush1.msra.mxu0 0.0
        %315 = vmatprep.subr.mxu0 0.0
        %316 = vmatpush1.msra.mxu0 0.0
        %317 = vmatprep.subr.mxu0 0.0
        %318 = vmatpush1.msra.mxu0 0.0
        %319 = vmatprep.subr.mxu0 0.0
        %320 = vmatpush1.msra.mxu0 0.0
        %321 = vmatprep.subr.mxu0 0.0
        %322 = vmatpush1.msra.mxu0 0.0
        %323 = vmatprep.subr.mxu0 0.0
        %324 = vmatpush1.msra.mxu0 0.0
        %325 = vmatprep.subr.mxu0 0.0
        %326 = vmatpush1.msra.mxu0 0.0
        %327 = vmatprep.subr.mxu0 0.0
        %328 = vmatpush1.msra.mxu0 0.0
        %329 = vmatprep.subr.mxu0 0.0
        %330 = vmatpush1.msra.mxu0 0.0
        %331 = vmatprep.subr.mxu0 0.0
        %332 = vmatpush1.msra.mxu0 0.0
        %333 = vmatprep.subr.mxu0 0.0
        %334 = vmatpush1.msra.mxu0 0.0
        %335 = vmatprep.subr.mxu0 0.0
        %336 = vmatpush1.msra.mxu0 0.0
        %337 = vmatprep.subr.mxu0 0.0
        %338 = vmatpush1.msra.mxu0 0.0
        %339 = vmatprep.subr.mxu0 0.0
        %340 = vmatpush1.msra.mxu0 0.0
        %341 = vmatprep.subr.mxu0 0.0
        %342 = vmatpush1.msra.mxu0 0.0
        %343 = vmatprep.subr.mxu0 0.0
        %344 = vmatpush1.msra.mxu0 0.0
        %345 = vmatprep.subr.mxu0 0.0
        %346 = vmatpush1.msra.mxu0 0.0
        %347 = vmatprep.subr.mxu0 0.0
        %348 = vmatpush1.msra.mxu0 0.0
        %349 = vmatprep.mubr.f32.mxu0 0.0
        %350 = vmatmul.mubr.f32.gmra.mrb[0].mxu0 %v283
        %v351 = vpop.f32.mrb[0].mxu0
        %v352 = vadd.f32 %v279, %v351
        %v353 = vpop.f32.mrb[0].mxu0
        %354 = vdwg.mxu0
        %v355 = vmul.f32 %v352, 0.35355338
        %357 = vrot.lane.b32.xlu0 %v352, 96
        %v358 = vpop.permute.xlu0 %357
        %vm359 = vcmask 64512
        %v361 = vsel %vm359, %v355, 0
        %v363 = vsel %vm359, %v358, 0
        %365 = vmatprep.subr.mxu0 0.0
        %366 = vmatpush1.xpose.msra.mxu0 %v363
        %367 = vmatprep.subr.mxu0 0.0
        %368 = vmatpush1.xpose.msra.mxu0 0.0
        %369 = vmatprep.subr.mxu0 0.0
        %370 = vmatpush1.xpose.msra.mxu0 0.0
        %371 = vmatprep.subr.mxu0 0.0
        %372 = vmatpush1.xpose.msra.mxu0 0.0
        %373 = vmatprep.subr.mxu0 0.0
        %374 = vmatpush1.xpose.msra.mxu0 0.0
        %375 = vmatprep.subr.mxu0 0.0
        %376 = vmatpush1.xpose.msra.mxu0 0.0
        %377 = vmatprep.subr.mxu0 0.0
        %378 = vmatpush1.xpose.msra.mxu0 0.0
        %379 = vmatprep.subr.mxu0 0.0
        %380 = vmatpush1.xpose.msra.mxu0 0.0
        %381 = vmatprep.subr.mxu0 0.0
        %382 = vmatpush1.xpose.msra.mxu0 0.0
        %383 = vmatprep.subr.mxu0 0.0
        %384 = vmatpush1.xpose.msra.mxu0 0.0
        %385 = vmatprep.subr.mxu0 0.0
        %386 = vmatpush1.xpose.msra.mxu0 0.0
        %387 = vmatprep.subr.mxu0 0.0
        %388 = vmatpush1.xpose.msra.mxu0 0.0
        %389 = vmatprep.subr.mxu0 0.0
        %390 = vmatpush1.xpose.msra.mxu0 0.0
        %391 = vmatprep.subr.mxu0 0.0
        %392 = vmatpush1.xpose.msra.mxu0 0.0
        %393 = vmatprep.subr.mxu0 0.0
        %394 = vmatpush1.xpose.msra.mxu0 0.0
        %395 = vmatprep.subr.mxu0 0.0
        %396 = vmatpush1.xpose.msra.mxu0 0.0
        %397 = vmatprep.subr.mxu0 0.0
        %398 = vmatpush1.xpose.msra.mxu0 0.0
        %399 = vmatprep.subr.mxu0 0.0
        %400 = vmatpush1.xpose.msra.mxu0 0.0
        %401 = vmatprep.subr.mxu0 0.0
        %402 = vmatpush1.xpose.msra.mxu0 0.0
        %403 = vmatprep.subr.mxu0 0.0
        %404 = vmatpush1.xpose.msra.mxu0 0.0
        %405 = vmatprep.subr.mxu0 0.0
        %406 = vmatpush1.xpose.msra.mxu0 0.0
        %407 = vmatprep.subr.mxu0 0.0
        %408 = vmatpush1.xpose.msra.mxu0 0.0
        %409 = vmatprep.subr.mxu0 0.0
        %410 = vmatpush1.xpose.msra.mxu0 0.0
        %411 = vmatprep.subr.mxu0 0.0
        %412 = vmatpush1.xpose.msra.mxu0 0.0
        %413 = vmatprep.subr.mxu0 0.0
        %414 = vmatpush1.xpose.msra.mxu0 0.0
        %415 = vmatprep.subr.mxu0 0.0
        %416 = vmatpush1.xpose.msra.mxu0 0.0
        %417 = vmatprep.subr.mxu0 0.0
        %418 = vmatpush1.xpose.msra.mxu0 0.0
        %419 = vmatprep.subr.mxu0 0.0
        %420 = vmatpush1.xpose.msra.mxu0 0.0
        %421 = vmatprep.subr.mxu0 0.0
        %422 = vmatpush1.xpose.msra.mxu0 0.0
        %423 = vmatprep.subr.mxu0 0.0
        %424 = vmatpush1.xpose.msra.mxu0 0.0
        %425 = vmatprep.subr.mxu0 0.0
        %426 = vmatpush1.xpose.msra.mxu0 0.0
        %427 = vmatprep.subr.mxu0 0.0
        %428 = vmatpush1.xpose.msra.mxu0 0.0
        %429 = vmatprep.mubr.f32.mxu0 0.0
        %430 = vmatmul.mubr.f32.gmra.mrb[0].mxu0 %v361
        %v431 = vpop.f32.mrb[0].mxu0
        %v432 = vadd.f32 0.0, %v431
        %v433 = vpop.f32.mrb[0].mxu0
        %434 = vdwg.mxu0
        %v435 = vsel %vm359, %v432, -inf
        %436 = vmax.xlane.f32.xlu0 %v435
        %v437 = vpop.xlane.xlu0 %436
        %v438 = vsub.f32 %v432, %v437
        %v439 = vmul.f32 %v438, 1.442695
        %v440 = vpow.pop %v439
        %v441 = vsel %vm359, %v440, 0.0
        %442 = vadd.xlane.f32.xlu0 %v441
        %v443 = vpop.xlane.xlu0 %442
        %444 = vrot.lane.b32.xlu0 %v352, 64
        %v445 = vpop.permute.xlu0 %444
        %v448 = vsel %vm359, %v440, 0
        %450 = vmatprep.subr.mxu0 0.0
        %451 = vmatpush1.msra.mxu0 %v445
        %452 = vmatprep.subr.mxu0 0.0
        %453 = vmatpush1.msra.mxu0 0.0
        %454 = vmatprep.subr.mxu0 0.0
        %455 = vmatpush1.msra.mxu0 0.0
        %456 = vmatprep.subr.mxu0 0.0
        %457 = vmatpush1.msra.mxu0 0.0
        %458 = vmatprep.subr.mxu0 0.0
        %459 = vmatpush1.msra.mxu0 0.0
        %460 = vmatprep.subr.mxu0 0.0
        %461 = vmatpush1.msra.mxu0 0.0
        %462 = vmatprep.subr.mxu0 0.0
        %463 = vmatpush1.msra.mxu0 0.0
        %464 = vmatprep.subr.mxu0 0.0
        %465 = vmatpush1.msra.mxu0 0.0
        %466 = vmatprep.subr.mxu0 0.0
        %467 = vmatpush1.msra.mxu0 0.0
        %468 = vmatprep.subr.mxu0 0.0
        %469 = vmatpush1.msra.mxu0 0.0
        %470 = vmatprep.subr.mxu0 0.0
        %471 = vmatpush1.msra.mxu0 0.0
        %472 = vmatprep.subr.mxu0 0.0
        %473 = vmatpush1.msra.mxu0 0.0
        %474 = vmatprep.subr.mxu0 0.0
        %475 = vmatpush1.msra.mxu0 0.0
        %476 = vmatprep.subr.mxu0 0.0
        %477 = vmatpush1.msra.mxu0 0.0
        %478 = vmatprep.subr.mxu0 0.0
        %479 = vmatpush1.msra.mxu0 0.0
        %480 = vmatprep.subr.mxu0 0.0
        %481 = vmatpush1.msra.mxu0 0.0
        %482 = vmatprep.subr.mxu0 0.0
        %483 = vmatpush1.msra.mxu0 0.0
        %484 = vmatprep.subr.mxu0 0.0
        %485 = vmatpush1.msra.mxu0 0.0
        %486 = vmatprep.subr.mxu0 0.0
        %487 = vmatpush1.msra.mxu0 0.0
        %488 = vmatprep.subr.mxu0 0.0
        %489 = vmatpush1.msra.mxu0 0.0
        %490 = vmatprep.subr.mxu0 0.0
        %491 = vmatpush1.msra.mxu0 0.0
        %492 = vmatprep.subr.mxu0 0.0
        %493 = vmatpush1.msra.mxu0 0.0
        %494 = vmatprep.subr.mxu0 0.0
        %495 = vmatpush1.msra.mxu0 0.0
        %496 = vmatprep.subr.mxu0 0.0
        %497 = vmatpush1.msra.mxu0 0.0
        %498 = vmatprep.subr.mxu0 0.0
        %499 = vmatpush1.msra.mxu0 0.0
        %500 = vmatprep.subr.mxu0 0.0
        %501 = vmatpush1.msra.mxu0 0.0
        %502 = vmatprep.subr.mxu0 0.0
        %503 = vmatpush1.msra.mxu0 0.0
        %504 = vmatprep.subr.mxu0 0.0
        %505 = vmatpush1.msra.mxu0 0.0
        %506 = vmatprep.subr.mxu0 0.0
        %507 = vmatpush1.msra.mxu0 0.0
        %508 = vmatprep.subr.mxu0 0.0
        %509 = vmatpush1.msra.mxu0 0.0
        %510 = vmatprep.subr.mxu0 0.0
        %511 = vmatpush1.msra.mxu0 0.0
        %512 = vmatprep.subr.mxu0 0.0
        %513 = vmatpush1.msra.mxu0 0.0
        %514 = vmatprep.mubr.f32.mxu0 0.0
        %515 = vmatmul.mubr.f32.gmra.mrb[0].mxu0 %v448
        %v516 = vpop.f32.mrb[0].mxu0
        %v517 = vadd.f32 0.0, %v516
        %v518 = vpop.f32.mrb[0].mxu0
        %519 = vdwg.mxu0
        %v520 = vrcp.pop %v443
        %v521 = vmul.f32 1.0, %v520
        %v522 = vmul.f32 %v517, %v521
        %523 = vrot.lane.b32.xlu0 %v355, 120
        %v524 = vpop.permute.xlu0 %523
        %525 = vrot.lane.b32.xlu0 %v352, 88
        %v526 = vpop.permute.xlu0 %525
        %v527 = vsel %vm359, %v524, 0
        %v529 = vsel %vm359, %v526, 0
        %531 = vmatprep.subr.mxu0 0.0
        %532 = vmatpush1.xpose.msra.mxu0 %v529
        %533 = vmatprep.subr.mxu0 0.0
        %534 = vmatpush1.xpose.msra.mxu0 0.0
        %535 = vmatprep.subr.mxu0 0.0
        %536 = vmatpush1.xpose.msra.mxu0 0.0
        %537 = vmatprep.subr.mxu0 0.0
        %538 = vmatpush1.xpose.msra.mxu0 0.0
        %539 = vmatprep.subr.mxu0 0.0
        %540 = vmatpush1.xpose.msra.mxu0 0.0
        %541 = vmatprep.subr.mxu0 0.0
        %542 = vmatpush1.xpose.msra.mxu0 0.0
        %543 = vmatprep.subr.mxu0 0.0
        %544 = vmatpush1.xpose.msra.mxu0 0.0
        %545 = vmatprep.subr.mxu0 0.0
        %546 = vmatpush1.xpose.msra.mxu0 0.0
        %547 = vmatprep.subr.mxu0 0.0
        %548 = vmatpush1.xpose.msra.mxu0 0.0
        %549 = vmatprep.subr.mxu0 0.0
        %550 = vmatpush1.xpose.msra.mxu0 0.0
        %551 = vmatprep.subr.mxu0 0.0
        %552 = vmatpush1.xpose.msra.mxu0 0.0
        %553 = vmatprep.subr.mxu0 0.0
        %554 = vmatpush1.xpose.msra.mxu0 0.0
        %555 = vmatprep.subr.mxu0 0.0
        %556 = vmatpush1.xpose.msra.mxu0 0.0
        %557 = vmatprep.subr.mxu0 0.0
        %558 = vmatpush1.xpose.msra.mxu0 0.0
        %559 = vmatprep.subr.mxu0 0.0
        %560 = vmatpush1.xpose.msra.mxu0 0.0
        %561 = vmatprep.subr.mxu0 0.0
        %562 = vmatpush1.xpose.msra.mxu0 0.0
        %563 = vmatprep.subr.mxu0 0.0
        %564 = vmatpush1.xpose.msra.mxu0 0.0
        %565 = vmatprep.subr.mxu0 0.0
        %566 = vmatpush1.xpose.msra.mxu0 0.0
        %567 = vmatprep.subr.mxu0 0.0
        %568 = vmatpush1.xpose.msra.mxu0 0.0
        %569 = vmatprep.subr.mxu0 0.0
        %570 = vmatpush1.xpose.msra.mxu0 0.0
        %571 = vmatprep.subr.mxu0 0.0
        %572 = vmatpush1.xpose.msra.mxu0 0.0
        %573 = vmatprep.subr.mxu0 0.0
        %574 = vmatpush1.xpose.msra.mxu0 0.0
        %575 = vmatprep.subr.mxu0 0.0
        %576 = vmatpush1.xpose.msra.mxu0 0.0
        %577 = vmatprep.subr.mxu0 0.0
        %578 = vmatpush1.xpose.msra.mxu0 0.0
        %579 = vmatprep.subr.mxu0 0.0
        %580 = vmatpush1.xpose.msra.mxu0 0.0
        %581 = vmatprep.subr.mxu0 0.0
        %582 = vmatpush1.xpose.msra.mxu0 0.0
        %583 = vmatprep.subr.mxu0 0.0
        %584 = vmatpush1.xpose.msra.mxu0 0.0
        %585 = vmatprep.subr.mxu0 0.0
        %586 = vmatpush1.xpose.msra.mxu0 0.0
        %587 = vmatprep.subr.mxu0 0.0
        %588 = vmatpush1.xpose.msra.mxu0 0.0
        %589 = vmatprep.subr.mxu0 0.0
        %590 = vmatpush1.xpose.msra.mxu0 0.0
        %591 = vmatprep.subr.mxu0 0.0
        %592 = vmatpush1.xpose.msra.mxu0 0.0
        %593 = vmatprep.subr.mxu0 0.0
        %594 = vmatpush1.xpose.msra.mxu0 0.0
        %595 = vmatprep.mubr.f32.mxu0 0.0
        %596 = vmatmul.mubr.f32.gmra.mrb[0].mxu0 %v527
        %v597 = vpop.f32.mrb[0].mxu0
        %v598 = vadd.f32 0.0, %v597
        %v599 = vpop.f32.mrb[0].mxu0
        %600 = vdwg.mxu0
        %v601 = vsel %vm359, %v598, -inf
        %602 = vmax.xlane.f32.xlu0 %v601
        %v603 = vpop.xlane.xlu0 %602
        %v604 = vsub.f32 %v598, %v603
        %v605 = vmul.f32 %v604, 1.442695
        %v606 = vpow.pop %v605
        %v607 = vsel %vm359, %v606, 0.0
        %608 = vadd.xlane.f32.xlu0 %v607
        %v609 = vpop.xlane.xlu0 %608
        %610 = vrot.lane.b32.xlu0 %v352, 56
        %v611 = vpop.permute.xlu0 %610
        %v614 = vsel %vm359, %v606, 0
        %616 = vmatprep.subr.mxu0 0.0
        %617 = vmatpush1.msra.mxu0 %v611
        %618 = vmatprep.subr.mxu0 0.0
        %619 = vmatpush1.msra.mxu0 0.0
        %620 = vmatprep.subr.mxu0 0.0
        %621 = vmatpush1.msra.mxu0 0.0
        %622 = vmatprep.subr.mxu0 0.0
        %623 = vmatpush1.msra.mxu0 0.0
        %624 = vmatprep.subr.mxu0 0.0
        %625 = vmatpush1.msra.mxu0 0.0
        %626 = vmatprep.subr.mxu0 0.0
        %627 = vmatpush1.msra.mxu0 0.0
        %628 = vmatprep.subr.mxu0 0.0
        %629 = vmatpush1.msra.mxu0 0.0
        %630 = vmatprep.subr.mxu0 0.0
        %631 = vmatpush1.msra.mxu0 0.0
        %632 = vmatprep.subr.mxu0 0.0
        %633 = vmatpush1.msra.mxu0 0.0
        %634 = vmatprep.subr.mxu0 0.0
        %635 = vmatpush1.msra.mxu0 0.0
        %636 = vmatprep.subr.mxu0 0.0
        %637 = vmatpush1.msra.mxu0 0.0
        %638 = vmatprep.subr.mxu0 0.0
        %639 = vmatpush1.msra.mxu0 0.0
        %640 = vmatprep.subr.mxu0 0.0
        %641 = vmatpush1.msra.mxu0 0.0
        %642 = vmatprep.subr.mxu0 0.0
        %643 = vmatpush1.msra.mxu0 0.0
        %644 = vmatprep.subr.mxu0 0.0
        %645 = vmatpush1.msra.mxu0 0.0
        %646 = vmatprep.subr.mxu0 0.0
        %647 = vmatpush1.msra.mxu0 0.0
        %648 = vmatprep.subr.mxu0 0.0
        %649 = vmatpush1.msra.mxu0 0.0
        %650 = vmatprep.subr.mxu0 0.0
        %651 = vmatpush1.msra.mxu0 0.0
        %652 = vmatprep.subr.mxu0 0.0
        %653 = vmatpush1.msra.mxu0 0.0
        %654 = vmatprep.subr.mxu0 0.0
        %655 = vmatpush1.msra.mxu0 0.0
        %656 = vmatprep.subr.mxu0 0.0
        %657 = vmatpush1.msra.mxu0 0.0
        %658 = vmatprep.subr.mxu0 0.0
        %659 = vmatpush1.msra.mxu0 0.0
        %660 = vmatprep.subr.mxu0 0.0
        %661 = vmatpush1.msra.mxu0 0.0
        %662 = vmatprep.subr.mxu0 0.0
        %663 = vmatpush1.msra.mxu0 0.0
        %664 = vmatprep.subr.mxu0 0.0
        %665 = vmatpush1.msra.mxu0 0.0
        %666 = vmatprep.subr.mxu0 0.0
        %667 = vmatpush1.msra.mxu0 0.0
        %668 = vmatprep.subr.mxu0 0.0
        %669 = vmatpush1.msra.mxu0 0.0
        %670 = vmatprep.subr.mxu0 0.0
        %671 = vmatpush1.msra.mxu0 0.0
        %672 = vmatprep.subr.mxu0 0.0
        %673 = vmatpush1.msra.mxu0 0.0
        %674 = vmatprep.subr.mxu0 0.0
        %675 = vmatpush1.msra.mxu0 0.0
        %676 = vmatprep.subr.mxu0 0.0
        %677 = vmatpush1.msra.mxu0 0.0
        %678 = vmatprep.subr.mxu0 0.0
        %679 = vmatpush1.msra.mxu0 0.0
        %680 = vmatprep.mubr.f32.mxu0 0.0
        %681 = vmatmul.mubr.f32.gmra.mrb[0].mxu0 %v614
        %v682 = vpop.f32.mrb[0].mxu0
        %v683 = vadd.f32 0.0, %v682
        %v684 = vpop.f32.mrb[0].mxu0
        %685 = vdwg.mxu0
        %v686 = vrcp.pop %v609
        %v687 = vmul.f32 1.0, %v686
        %v688 = vmul.f32 %v683, %v687
        %689 = vrot.lane.b32.xlu0 %v355, 112
        %v690 = vpop.permute.xlu0 %689
        %691 = vrot.lane.b32.xlu0 %v352, 80
        %v692 = vpop.permute.xlu0 %691
        %v693 = vsel %vm359, %v690, 0
        %v695 = vsel %vm359, %v692, 0
        %697 = vmatprep.subr.mxu0 0.0
        %698 = vmatpush1.xpose.msra.mxu0 %v695
        %699 = vmatprep.subr.mxu0 0.0
        %700 = vmatpush1.xpose.msra.mxu0 0.0
        %701 = vmatprep.subr.mxu0 0.0
        %702 = vmatpush1.xpose.msra.mxu0 0.0
        %703 = vmatprep.subr.mxu0 0.0
        %704 = vmatpush1.xpose.msra.mxu0 0.0
        %705 = vmatprep.subr.mxu0 0.0
        %706 = vmatpush1.xpose.msra.mxu0 0.0
        %707 = vmatprep.subr.mxu0 0.0
        %708 = vmatpush1.xpose.msra.mxu0 0.0
        %709 = vmatprep.subr.mxu0 0.0
        %710 = vmatpush1.xpose.msra.mxu0 0.0
        %711 = vmatprep.subr.mxu0 0.0
        %712 = vmatpush1.xpose.msra.mxu0 0.0
        %713 = vmatprep.subr.mxu0 0.0
        %714 = vmatpush1.xpose.msra.mxu0 0.0
        %715 = vmatprep.subr.mxu0 0.0
        %716 = vmatpush1.xpose.msra.mxu0 0.0
        %717 = vmatprep.subr.mxu0 0.0
        %718 = vmatpush1.xpose.msra.mxu0 0.0
        %719 = vmatprep.subr.mxu0 0.0
        %720 = vmatpush1.xpose.msra.mxu0 0.0
        %721 = vmatprep.subr.mxu0 0.0
        %722 = vmatpush1.xpose.msra.mxu0 0.0
        %723 = vmatprep.subr.mxu0 0.0
        %724 = vmatpush1.xpose.msra.mxu0 0.0
        %725 = vmatprep.subr.mxu0 0.0
        %726 = vmatpush1.xpose.msra.mxu0 0.0
        %727 = vmatprep.subr.mxu0 0.0
        %728 = vmatpush1.xpose.msra.mxu0 0.0
        %729 = vmatprep.subr.mxu0 0.0
        %730 = vmatpush1.xpose.msra.mxu0 0.0
        %731 = vmatprep.subr.mxu0 0.0
        %732 = vmatpush1.xpose.msra.mxu0 0.0
        %733 = vmatprep.subr.mxu0 0.0
        %734 = vmatpush1.xpose.msra.mxu0 0.0
        %735 = vmatprep.subr.mxu0 0.0
        %736 = vmatpush1.xpose.msra.mxu0 0.0
        %737 = vmatprep.subr.mxu0 0.0
        %738 = vmatpush1.xpose.msra.mxu0 0.0
        %739 = vmatprep.subr.mxu0 0.0
        %740 = vmatpush1.xpose.msra.mxu0 0.0
        %741 = vmatprep.subr.mxu0 0.0
        %742 = vmatpush1.xpose.msra.mxu0 0.0
        %743 = vmatprep.subr.mxu0 0.0
        %744 = vmatpush1.xpose.msra.mxu0 0.0
        %745 = vmatprep.subr.mxu0 0.0
        %746 = vmatpush1.xpose.msra.mxu0 0.0
        %747 = vmatprep.subr.mxu0 0.0
        %748 = vmatpush1.xpose.msra.mxu0 0.0
        %749 = vmatprep.subr.mxu0 0.0
        %750 = vmatpush1.xpose.msra.mxu0 0.0
        %751 = vmatprep.subr.mxu0 0.0
        %752 = vmatpush1.xpose.msra.mxu0 0.0
        %753 = vmatprep.subr.mxu0 0.0
        %754 = vmatpush1.xpose.msra.mxu0 0.0
        %755 = vmatprep.subr.mxu0 0.0
        %756 = vmatpush1.xpose.msra.mxu0 0.0
        %757 = vmatprep.subr.mxu0 0.0
        %758 = vmatpush1.xpose.msra.mxu0 0.0
        %759 = vmatprep.subr.mxu0 0.0
        %760 = vmatpush1.xpose.msra.mxu0 0.0
        %761 = vmatprep.mubr.f32.mxu0 0.0
        %762 = vmatmul.mubr.f32.gmra.mrb[0].mxu0 %v693
        %v763 = vpop.f32.mrb[0].mxu0
        %v764 = vadd.f32 0.0, %v763
        %v765 = vpop.f32.mrb[0].mxu0
        %766 = vdwg.mxu0
        %v767 = vsel %vm359, %v764, -inf
        %768 = vmax.xlane.f32.xlu0 %v767
        %v769 = vpop.xlane.xlu0 %768
        %v770 = vsub.f32 %v764, %v769
        %v771 = vmul.f32 %v770, 1.442695
        %v772 = vpow.pop %v771
        %v773 = vsel %vm359, %v772, 0.0
        %774 = vadd.xlane.f32.xlu0 %v773
        %v775 = vpop.xlane.xlu0 %774
        %776 = vrot.lane.b32.xlu0 %v352, 48
        %v777 = vpop.permute.xlu0 %776
        %v780 = vsel %vm359, %v772, 0
        %782 = vmatprep.subr.mxu0 0.0
        %783 = vmatpush1.msra.mxu0 %v777
        %784 = vmatprep.subr.mxu0 0.0
        %785 = vmatpush1.msra.mxu0 0.0
        %786 = vmatprep.subr.mxu0 0.0
        %787 = vmatpush1.msra.mxu0 0.0
        %788 = vmatprep.subr.mxu0 0.0
        %789 = vmatpush1.msra.mxu0 0.0
        %790 = vmatprep.subr.mxu0 0.0
        %791 = vmatpush1.msra.mxu0 0.0
        %792 = vmatprep.subr.mxu0 0.0
        %793 = vmatpush1.msra.mxu0 0.0
        %794 = vmatprep.subr.mxu0 0.0
        %795 = vmatpush1.msra.mxu0 0.0
        %796 = vmatprep.subr.mxu0 0.0
        %797 = vmatpush1.msra.mxu0 0.0
        %798 = vmatprep.subr.mxu0 0.0
        %799 = vmatpush1.msra.mxu0 0.0
        %800 = vmatprep.subr.mxu0 0.0
        %801 = vmatpush1.msra.mxu0 0.0
        %802 = vmatprep.subr.mxu0 0.0
        %803 = vmatpush1.msra.mxu0 0.0
        %804 = vmatprep.subr.mxu0 0.0
        %805 = vmatpush1.msra.mxu0 0.0
        %806 = vmatprep.subr.mxu0 0.0
        %807 = vmatpush1.msra.mxu0 0.0
        %808 = vmatprep.subr.mxu0 0.0
        %809 = vmatpush1.msra.mxu0 0.0
        %810 = vmatprep.subr.mxu0 0.0
        %811 = vmatpush1.msra.mxu0 0.0
        %812 = vmatprep.subr.mxu0 0.0
        %813 = vmatpush1.msra.mxu0 0.0
        %814 = vmatprep.subr.mxu0 0.0
        %815 = vmatpush1.msra.mxu0 0.0
        %816 = vmatprep.subr.mxu0 0.0
        %817 = vmatpush1.msra.mxu0 0.0
        %818 = vmatprep.subr.mxu0 0.0
        %819 = vmatpush1.msra.mxu0 0.0
        %820 = vmatprep.subr.mxu0 0.0
        %821 = vmatpush1.msra.mxu0 0.0
        %822 = vmatprep.subr.mxu0 0.0
        %823 = vmatpush1.msra.mxu0 0.0
        %824 = vmatprep.subr.mxu0 0.0
        %825 = vmatpush1.msra.mxu0 0.0
        %826 = vmatprep.subr.mxu0 0.0
        %827 = vmatpush1.msra.mxu0 0.0
        %828 = vmatprep.subr.mxu0 0.0
        %829 = vmatpush1.msra.mxu0 0.0
        %830 = vmatprep.subr.mxu0 0.0
        %831 = vmatpush1.msra.mxu0 0.0
        %832 = vmatprep.subr.mxu0 0.0
        %833 = vmatpush1.msra.mxu0 0.0
        %834 = vmatprep.subr.mxu0 0.0
        %835 = vmatpush1.msra.mxu0 0.0
        %836 = vmatprep.subr.mxu0 0.0
        %837 = vmatpush1.msra.mxu0 0.0
        %838 = vmatprep.subr.mxu0 0.0
        %839 = vmatpush1.msra.mxu0 0.0
        %840 = vmatprep.subr.mxu0 0.0
        %841 = vmatpush1.msra.mxu0 0.0
        %842 = vmatprep.subr.mxu0 0.0
        %843 = vmatpush1.msra.mxu0 0.0
        %844 = vmatprep.subr.mxu0 0.0
        %845 = vmatpush1.msra.mxu0 0.0
        %846 = vmatprep.mubr.f32.mxu0 0.0
        %847 = vmatmul.mubr.f32.gmra.mrb[0].mxu0 %v780
        %v848 = vpop.f32.mrb[0].mxu0
        %v849 = vadd.f32 0.0, %v848
        %v850 = vpop.f32.mrb[0].mxu0
        %851 = vdwg.mxu0
        %v852 = vrcp.pop %v775
        %v853 = vmul.f32 1.0, %v852
        %v854 = vmul.f32 %v849, %v853
        %855 = vrot.lane.b32.xlu0 %v355, 104
        %v856 = vpop.permute.xlu0 %855
        %857 = vrot.lane.b32.xlu0 %v352, 72
        %v858 = vpop.permute.xlu0 %857
        %v859 = vsel %vm359, %v856, 0
        %v861 = vsel %vm359, %v858, 0
        %863 = vmatprep.subr.mxu0 0.0
        %864 = vmatpush1.xpose.msra.mxu0 %v861
        %865 = vmatprep.subr.mxu0 0.0
        %866 = vmatpush1.xpose.msra.mxu0 0.0
        %867 = vmatprep.subr.mxu0 0.0
        %868 = vmatpush1.xpose.msra.mxu0 0.0
        %869 = vmatprep.subr.mxu0 0.0
        %870 = vmatpush1.xpose.msra.mxu0 0.0
        %871 = vmatprep.subr.mxu0 0.0
        %872 = vmatpush1.xpose.msra.mxu0 0.0
        %873 = vmatprep.subr.mxu0 0.0
        %874 = vmatpush1.xpose.msra.mxu0 0.0
        %875 = vmatprep.subr.mxu0 0.0
        %876 = vmatpush1.xpose.msra.mxu0 0.0
        %877 = vmatprep.subr.mxu0 0.0
        %878 = vmatpush1.xpose.msra.mxu0 0.0
        %879 = vmatprep.subr.mxu0 0.0
        %880 = vmatpush1.xpose.msra.mxu0 0.0
        %881 = vmatprep.subr.mxu0 0.0
        %882 = vmatpush1.xpose.msra.mxu0 0.0
        %883 = vmatprep.subr.mxu0 0.0
        %884 = vmatpush1.xpose.msra.mxu0 0.0
        %885 = vmatprep.subr.mxu0 0.0
        %886 = vmatpush1.xpose.msra.mxu0 0.0
        %887 = vmatprep.subr.mxu0 0.0
        %888 = vmatpush1.xpose.msra.mxu0 0.0
        %889 = vmatprep.subr.mxu0 0.0
        %890 = vmatpush1.xpose.msra.mxu0 0.0
        %891 = vmatprep.subr.mxu0 0.0
        %892 = vmatpush1.xpose.msra.mxu0 0.0
        %893 = vmatprep.subr.mxu0 0.0
        %894 = vmatpush1.xpose.msra.mxu0 0.0
        %895 = vmatprep.subr.mxu0 0.0
        %896 = vmatpush1.xpose.msra.mxu0 0.0
        %897 = vmatprep.subr.mxu0 0.0
        %898 = vmatpush1.xpose.msra.mxu0 0.0
        %899 = vmatprep.subr.mxu0 0.0
        %900 = vmatpush1.xpose.msra.mxu0 0.0
        %901 = vmatprep.subr.mxu0 0.0
        %902 = vmatpush1.xpose.msra.mxu0 0.0
        %903 = vmatprep.subr.mxu0 0.0
        %904 = vmatpush1.xpose.msra.mxu0 0.0
        %905 = vmatprep.subr.mxu0 0.0
        %906 = vmatpush1.xpose.msra.mxu0 0.0
        %907 = vmatprep.subr.mxu0 0.0
        %908 = vmatpush1.xpose.msra.mxu0 0.0
        %909 = vmatprep.subr.mxu0 0.0
        %910 = vmatpush1.xpose.msra.mxu0 0.0
        %911 = vmatprep.subr.mxu0 0.0
        %912 = vmatpush1.xpose.msra.mxu0 0.0
        %913 = vmatprep.subr.mxu0 0.0
        %914 = vmatpush1.xpose.msra.mxu0 0.0
        %915 = vmatprep.subr.mxu0 0.0
        %916 = vmatpush1.xpose.msra.mxu0 0.0
        %917 = vmatprep.subr.mxu0 0.0
        %918 = vmatpush1.xpose.msra.mxu0 0.0
        %919 = vmatprep.subr.mxu0 0.0
        %920 = vmatpush1.xpose.msra.mxu0 0.0
        %921 = vmatprep.subr.mxu0 0.0
        %922 = vmatpush1.xpose.msra.mxu0 0.0
        %923 = vmatprep.subr.mxu0 0.0
        %924 = vmatpush1.xpose.msra.mxu0 0.0
        %925 = vmatprep.subr.mxu0 0.0
        %926 = vmatpush1.xpose.msra.mxu0 0.0
        %927 = vmatprep.mubr.f32.mxu0 0.0
        %928 = vmatmul.mubr.f32.gmra.mrb[0].mxu0 %v859
        %v929 = vpop.f32.mrb[0].mxu0
        %v930 = vadd.f32 0.0, %v929
        %v931 = vpop.f32.mrb[0].mxu0
        %932 = vdwg.mxu0
        %v933 = vsel %vm359, %v930, -inf
        %934 = vmax.xlane.f32.xlu0 %v933
        %v935 = vpop.xlane.xlu0 %934
        %v936 = vsub.f32 %v930, %v935
        %v937 = vmul.f32 %v936, 1.442695
        %v938 = vpow.pop %v937
        %v939 = vsel %vm359, %v938, 0.0
        %940 = vadd.xlane.f32.xlu0 %v939
        %v941 = vpop.xlane.xlu0 %940
        %942 = vrot.lane.b32.xlu0 %v352, 40
        %v943 = vpop.permute.xlu0 %942
        %v946 = vsel %vm359, %v938, 0
        %948 = vmatprep.subr.mxu0 0.0
        %949 = vmatpush1.msra.mxu0 %v943
        %950 = vmatprep.subr.mxu0 0.0
        %951 = vmatpush1.msra.mxu0 0.0
        %952 = vmatprep.subr.mxu0 0.0
        %953 = vmatpush1.msra.mxu0 0.0
        %954 = vmatprep.subr.mxu0 0.0
        %955 = vmatpush1.msra.mxu0 0.0
        %956 = vmatprep.subr.mxu0 0.0
        %957 = vmatpush1.msra.mxu0 0.0
        %958 = vmatprep.subr.mxu0 0.0
        %959 = vmatpush1.msra.mxu0 0.0
        %960 = vmatprep.subr.mxu0 0.0
        %961 = vmatpush1.msra.mxu0 0.0
        %962 = vmatprep.subr.mxu0 0.0
        %963 = vmatpush1.msra.mxu0 0.0
        %964 = vmatprep.subr.mxu0 0.0
        %965 = vmatpush1.msra.mxu0 0.0
        %966 = vmatprep.subr.mxu0 0.0
        %967 = vmatpush1.msra.mxu0 0.0
        %968 = vmatprep.subr.mxu0 0.0
        %969 = vmatpush1.msra.mxu0 0.0
        %970 = vmatprep.subr.mxu0 0.0
        %971 = vmatpush1.msra.mxu0 0.0
        %972 = vmatprep.subr.mxu0 0.0
        %973 = vmatpush1.msra.mxu0 0.0
        %974 = vmatprep.subr.mxu0 0.0
        %975 = vmatpush1.msra.mxu0 0.0
        %976 = vmatprep.subr.mxu0 0.0
        %977 = vmatpush1.msra.mxu0 0.0
        %978 = vmatprep.subr.mxu0 0.0
        %979 = vmatpush1.msra.mxu0 0.0
        %980 = vmatprep.subr.mxu0 0.0
        %981 = vmatpush1.msra.mxu0 0.0
        %982 = vmatprep.subr.mxu0 0.0
        %983 = vmatpush1.msra.mxu0 0.0
        %984 = vmatprep.subr.mxu0 0.0
        %985 = vmatpush1.msra.mxu0 0.0
        %986 = vmatprep.subr.mxu0 0.0
        %987 = vmatpush1.msra.mxu0 0.0
        %988 = vmatprep.subr.mxu0 0.0
        %989 = vmatpush1.msra.mxu0 0.0
        %990 = vmatprep.subr.mxu0 0.0
        %991 = vmatpush1.msra.mxu0 0.0
        %992 = vmatprep.subr.mxu0 0.0
        %993 = vmatpush1.msra.mxu0 0.0
        %994 = vmatprep.subr.mxu0 0.0
        %995 = vmatpush1.msra.mxu0 0.0
        %996 = vmatprep.subr.mxu0 0.0
        %997 = vmatpush1.msra.mxu0 0.0
        %998 = vmatprep.subr.mxu0 0.0
        %999 = vmatpush1.msra.mxu0 0.0
        %1000 = vmatprep.subr.mxu0 0.0
        %1001 = vmatpush1.msra.mxu0 0.0
        %1002 = vmatprep.subr.mxu0 0.0
        %1003 = vmatpush1.msra.mxu0 0.0
        %1004 = vmatprep.subr.mxu0 0.0
        %1005 = vmatpush1.msra.mxu0 0.0
        %1006 = vmatprep.subr.mxu0 0.0
        %1007 = vmatpush1.msra.mxu0 0.0
        %1008 = vmatprep.subr.mxu0 0.0
        %1009 = vmatpush1.msra.mxu0 0.0
        %1010 = vmatprep.subr.mxu0 0.0
        %1011 = vmatpush1.msra.mxu0 0.0
        %1012 = vmatprep.mubr.f32.mxu0 0.0
        %1013 = vmatmul.mubr.f32.gmra.mrb[0].mxu0 %v946
        %v1014 = vpop.f32.mrb[0].mxu0
        %v1015 = vadd.f32 0.0, %v1014
        %v1016 = vpop.f32.mrb[0].mxu0
        %1017 = vdwg.mxu0
        %v1018 = vrcp.pop %v941
        %v1019 = vmul.f32 1.0, %v1018
        %v1020 = vmul.f32 %v1015, %v1019
        %1022 = vrot.lane.b32.xlu0 %v688, 8
        %v1023 = vpop.permute.xlu0 %1022
        %1026 = vrot.lane.b32.xlu0 %v854, 16
        %v1027 = vpop.permute.xlu0 %1026
        %1030 = vrot.lane.b32.xlu0 %v1020, 24
        %v1031 = vpop.permute.xlu0 %1030
        %v1033 = vsel %vm359, %v522, %v1023
        %vm1034 = vcmask 130048
        %v1035 = vsel %vm1034, %v1033, %v1027
        %vm1036 = vcmask 195584
        %v1037 = vsel %vm1036, %v1035, %v1031
        %v1038 = vld [vmem:[#allocation7] sm:$0xff]
        %v1039 = vld [vmem:[#allocation7 + $0x8] sm:$0xff]
        %v1040 = vld [vmem:[#allocation7 + $0x10] sm:$0xff]
        %v1041 = vld [vmem:[#allocation7 + $0x18] sm:$0xff]
        %v1042 = vld [vmem:[%s4] sm:$0x1]
        %v1044 = vlaneseq
        %v1045 = vshrl.u32 %v1044, 7
        %v1046 = vsub.s32 0, %v1045
        %v1047 = vrot.slane %v1042, %v1046
        %v1050 = vsel %vm281, %v1037, 0
        %1052 = vmatprep.subr.mxu0 0.0
        %1053 = vmatpush1.msra.mxu0 %v1038
        %1054 = vmatprep.subr.mxu0 0.0
        %1055 = vmatpush1.msra.mxu0 %v1039
        %1056 = vmatprep.subr.mxu0 0.0
        %1057 = vmatpush1.msra.mxu0 %v1040
        %1058 = vmatprep.subr.mxu0 0.0
        %1059 = vmatpush1.msra.mxu0 %v1041
        %1060 = vmatprep.subr.mxu0 0.0
        %1061 = vmatpush1.msra.mxu0 0.0
        %1062 = vmatprep.subr.mxu0 0.0
        %1063 = vmatpush1.msra.mxu0 0.0
        %1064 = vmatprep.subr.mxu0 0.0
        %1065 = vmatpush1.msra.mxu0 0.0
        %1066 = vmatprep.subr.mxu0 0.0
        %1067 = vmatpush1.msra.mxu0 0.0
        %1068 = vmatprep.subr.mxu0 0.0
        %1069 = vmatpush1.msra.mxu0 0.0
        %1070 = vmatprep.subr.mxu0 0.0
        %1071 = vmatpush1.msra.mxu0 0.0
        %1072 = vmatprep.subr.mxu0 0.0
        %1073 = vmatpush1.msra.mxu0 0.0
        %1074 = vmatprep.subr.mxu0 0.0
        %1075 = vmatpush1.msra.mxu0 0.0
        %1076 = vmatprep.subr.mxu0 0.0
        %1077 = vmatpush1.msra.mxu0 0.0
        %1078 = vmatprep.subr.mxu0 0.0
        %1079 = vmatpush1.msra.mxu0 0.0
        %1080 = vmatprep.subr.mxu0 0.0
        %1081 = vmatpush1.msra.mxu0 0.0
        %1082 = vmatprep.subr.mxu0 0.0
        %1083 = vmatpush1.msra.mxu0 0.0
        %1084 = vmatprep.subr.mxu0 0.0
        %1085 = vmatpush1.msra.mxu0 0.0
        %1086 = vmatprep.subr.mxu0 0.0
        %1087 = vmatpush1.msra.mxu0 0.0
        %1088 = vmatprep.subr.mxu0 0.0
        %1089 = vmatpush1.msra.mxu0 0.0
        %1090 = vmatprep.subr.mxu0 0.0
        %1091 = vmatpush1.msra.mxu0 0.0
        %1092 = vmatprep.subr.mxu0 0.0
        %1093 = vmatpush1.msra.mxu0 0.0
        %1094 = vmatprep.subr.mxu0 0.0
        %1095 = vmatpush1.msra.mxu0 0.0
        %1096 = vmatprep.subr.mxu0 0.0
        %1097 = vmatpush1.msra.mxu0 0.0
        %1098 = vmatprep.subr.mxu0 0.0
        %1099 = vmatpush1.msra.mxu0 0.0
        %1100 = vmatprep.subr.mxu0 0.0
        %1101 = vmatpush1.msra.mxu0 0.0
        %1102 = vmatprep.subr.mxu0 0.0
        %1103 = vmatpush1.msra.mxu0 0.0
        %1104 = vmatprep.subr.mxu0 0.0
        %1105 = vmatpush1.msra.mxu0 0.0
        %1106 = vmatprep.subr.mxu0 0.0
        %1107 = vmatpush1.msra.mxu0 0.0
        %1108 = vmatprep.subr.mxu0 0.0
        %1109 = vmatpush1.msra.mxu0 0.0
        %1110 = vmatprep.subr.mxu0 0.0
        %1111 = vmatpush1.msra.mxu0 0.0
        %1112 = vmatprep.subr.mxu0 0.0
        %1113 = vmatpush1.msra.mxu0 0.0
        %1114 = vmatprep.subr.mxu0 0.0
        %1115 = vmatpush1.msra.mxu0 0.0
        %1116 = vmatprep.mubr.f32.mxu0 0.0
        %1117 = vmatmul.mubr.f32.gmra.mrb[0].mxu0 %v1050
        %v1118 = vpop.f32.mrb[0].mxu0
        %v1119 = vadd.f32 %v1047, %v1118
        %v1120 = vpop.f32.mrb[0].mxu0
        %1121 = vdwg.mxu0
        %1122 = vst.msk [vmem:[%s268] sm:$0xff] %vm281, %v1119
        %s1123 = sand.u32 %s141, 1
        %s1124 = scalar_lea.sflag [#allocation4], %s1123
        %s1125 = sand.u32 %s141, 1
        %s1126 = smul.addr %s1125, 8
        %s1127 = scalar_lea.vmem [#allocation8], %s1126
        // Predicated region
        $region53: #{tpu_custom_call.1} parent=39 // pred_check
          %p1128 = pneg %p151
        $region54: #{tpu_custom_call.1} parent=39 // pred_check_branch
          %1130 = sbr.rel (%p1128) target = $region56
        $region55: #{tpu_custom_call.1} parent=39 // pred_region
          %s1132 = ssub.s32 128, 128
          %1133 = vsyncadd %s1124, %s1132
          %s1134 = smul.addr %s23, 128
          %s1135 = scalar_lea.hbm %s5, %s1134
          %s1137 = sshll.u32 %s1127, 4
          %s1138 = int_to_ptr.vmem [resolvable:$true] %s1137
          %1140 = dma.vmem_to_hbm [thread:$0]  %s1138, 128, %s1135, %s1124
        $region56: #{tpu_custom_call.1} parent=39 // pred_fallthru
          _
      $region40: #{tpu_custom_call.1} parent=5 // pred_fallthru
        _
      %p1141 = scmp.le.s32.totalorder 2, %s18
      // Predicated region
      $region57: #{tpu_custom_call.1} parent=5 // pred_check
        %p1142 = pneg %p1141
      $region58: #{tpu_custom_call.1} parent=5 // pred_check_branch
        %1144 = sbr.rel (%p1142) target = $region60
      $region59: #{tpu_custom_call.1} parent=5 // pred_region
        %s1145 = ssub.s32 %s18, 2
        // Predicated region
        $region61: #{tpu_custom_call.1} parent=59 // pred_check
          %p1146 = pneg %p157
        $region62: #{tpu_custom_call.1} parent=59 // pred_check_branch
          %1148 = sbr.rel (%p1146) target = $region64
        $region63: #{tpu_custom_call.1} parent=59 // pred_region
          %s1149 = sand.u32 %s142, 1
          %s1150 = scalar_lea.sflag [#allocation4], %s1149
          %s1151 = sand.u32 %s142, 1
          %s1152 = smul.addr %s1151, 8
          %s1153 = scalar_lea.vmem [#allocation8], %s1152
          %1154 = dma.done %s1150, 128
        $region64: #{tpu_custom_call.1} parent=59 // pred_fallthru
          _
      $region60: #{tpu_custom_call.1} parent=5 // pred_fallthru
        _
    $region6: #{tpu_custom_call.1} parent=1 // loop_footer
      %s22 = sadd.s32 1, %s18
    $region7: #{tpu_custom_call.1} parent=1 // loop_footer_branch
      %17 = sbr.rel target = $region3
    $region8: #{tpu_custom_call.1} parent=1 // loop_exit
      _
    %1155 = vsyncpa [#allocation3], 1
    %s1156 = scalar_lea.sflag [#allocation3], 1
    %1157 = vsyncpa %s1156, 1
    %1158 = vsyncpa [#allocation6], 1
    %1159 = vsyncpa [#allocation4], 1
    %s1160 = scalar_lea.sflag [#allocation4], 1
    %1161 = vsyncpa %s1160, 1

</llo_original>
